<compile_context>
chip_gen: v5e
topology: v5e:2x2
jax: 0.10.0
libtpu: 0.0.40
codegen_flags: <defaults>
</compile_context>

<pallas_src>
import functools

import jax
import jax.numpy as jnp
from jax.experimental import pallas as pl
from jax.experimental.pallas import tpu as pltpu


def _round_up(x, m):
    return ((x + m - 1) // m) * m


# ----------------------------------------------------------------- kernels

def _head_kernel(x_ref,
                 w1_ref, b1_ref,
                 wh_ref, bh_ref,
                 whd_ref, bhd_ref,
                 head_ref):
    """Fused 3-matmul forward for one batch tile.

    head columns:  [0, A)  -> advantages
                   A       -> value
                   (A, HW) -> zeros (lane padding so the store is 128-dense)
    """
    x = x_ref[...]                                                # (TB, S)

    # feature layer
    feats = jnp.dot(x, w1_ref[...], preferred_element_type=jnp.float32)
    feats = jnp.maximum(feats + b1_ref[...], 0.0)                 # (TB, U) f32

    # fused value|advantage hidden layer: one (U, 2U) matmul
    h = jnp.dot(feats.astype(wh_ref.dtype), wh_ref[...],
                preferred_element_type=jnp.float32)
    h = jnp.maximum(h + bh_ref[...], 0.0)                         # (TB, 2U) f32

    # fused head: one (2U, HEAD_W) matmul, lane-dense output
    head_ref[...] = (jnp.dot(h.astype(whd_ref.dtype), whd_ref[...],
                             preferred_element_type=jnp.float32)
                     + bhd_ref[...])                              # (TB, HEAD_W)


def _combine_kernel(value_col, mean_ref, head_ref, out_ref):
    """Finalize pass: q = values + (advantages - global_mean).

    Writes a full lane-dense (TB, HEAD_W) slab; only columns [0, A) are
    meaningful and are sliced out in the wrapper.
    """
    head = head_ref[...]                                          # (TB, HEAD_W)
    values = head[:, value_col:value_col + 1]                     # (TB, 1)
    out_ref[...] = head + values - mean_ref[0, 0]


# ----------------------------------------------------------------- wrappers

def init_params(key, state_size, action_size, units):
    """Deterministic synthetic parameters (PyTorch Linear shapes, pre-transposed)."""
    ks = jax.random.split(key, 10)

    def lin(kw, kb, fan_in, fan_out):
        bound = 1.0 / jnp.sqrt(jnp.float32(fan_in))
        w = jax.random.uniform(kw, (fan_in, fan_out), jnp.float32, -bound, bound)
        b = jax.random.uniform(kb, (1, fan_out), jnp.float32, -bound, bound)
        return w, b

    w1, b1 = lin(ks[0], ks[1], state_size, units)
    wv1, bv1 = lin(ks[2], ks[3], units, units)
    wv2, bv2 = lin(ks[4], ks[5], units, 1)
    wa1, ba1 = lin(ks[6], ks[7], units, units)
    wa2, ba2 = lin(ks[8], ks[9], units, action_size)
    return dict(w1=w1, b1=b1, wv1=wv1, bv1=bv1, wv2=wv2, bv2=bv2,
                wa1=wa1, ba1=ba1, wa2=wa2, ba2=ba2)


def prepare_params(params, compute_dtype=jnp.float32):
    """Fuse the per-stream weights into the 3-matmul layout.

    wh  : (U, 2U)       = [Wv1 | Wa1]           (hidden fusion, 128 lanes at U=64)
    whd : (2U, HEAD_W)  = [[0, Wv2, 0], [Wa2, 0, 0]]  (head fusion, lane-padded)
          columns [0, A) = advantages, column A = value, rest zero.
    Biases are kept in f32 and added after the f32 MXU accumulation.
    """
    U = params["wv1"].shape[0]
    A = params["wa2"].shape[1]
    head_w = _round_up(A + 1, 128)

    wh = jnp.concatenate([params["wv1"], params["wa1"]], axis=1)   # (U, 2U)
    bh = jnp.concatenate([params["bv1"], params["ba1"]], axis=1)   # (1, 2U)

    whd = jnp.zeros((2 * U, head_w), jnp.float32)
    whd = whd.at[U:, :A].set(params["wa2"])                        # adv block (from ah)
    whd = whd.at[:U, A].set(params["wv2"][:, 0])                   # value column (from vh)
    bhd = jnp.zeros((1, head_w), jnp.float32)
    bhd = bhd.at[0, :A].set(params["ba2"][0])
    bhd = bhd.at[0, A].set(params["bv2"][0, 0])

    return dict(
        w1=params["w1"].astype(compute_dtype),
        b1=params["b1"].astype(jnp.float32),
        wh=wh.astype(compute_dtype),
        bh=bh.astype(jnp.float32),
        whd=whd.astype(compute_dtype),
        bhd=bhd.astype(jnp.float32),
    )


def dueling_forward(state, fused, action_size, *, tile_b=512):
    """state: (B, state_size) float32.  Returns qvals (B, action_size) float32.

    VMEM budget per batch tile (worst case, f32, TB=512, U=64, HEAD_W=128):
      2x double-buffered state (2*TB*S*4 ~ 64 KB) + resident weights (~110 KB)
      + head output (2*TB*HEAD_W*4 ~ 512 KB) + f32 intermediates (~400 KB)
      ~= 1.1 MB  -> far inside v7x's 32 MiB scoped / 64 MiB physical VMEM,
      so no explicit vmem_limit_bytes is needed at these feature dims.
    """
    B, S = state.shape
    A = int(action_size)
    U = fused["w1"].shape[1]
    two_u = fused["whd"].shape[0]
    head_w = fused["whd"].shape[1]
    cdt = fused["w1"].dtype

    # Batch tiling: tile rows must be a multiple of 8 sublanes; pad B up to a
    # whole number of tiles (padded rows are excluded from the mean & output).
    tb = _round_up(min(int(tile_b), _round_up(B, 8)), 8)
    b_pad = _round_up(B, tb)
    x = state.astype(cdt)
    if b_pad != B:
        x = jnp.pad(x, ((0, b_pad - B), (0, 0)))

    grid = (b_pad // tb,)

    def resident(shape):  # weights: same block every grid step -> stay in VMEM
        return pl.BlockSpec(shape, lambda i: (0, 0))

    # ---- phase 1: fused 3-matmul head (advantages | value | padding) -------
    head = pl.pallas_call(
        _head_kernel,
        out_shape=jax.ShapeDtypeStruct((b_pad, head_w), jnp.float32),
        grid=grid,
        in_specs=[
            pl.BlockSpec((tb, S), lambda i: (i, 0)),
            resident((S, U)), resident((1, U)),
            resident((U, two_u)), resident((1, two_u)),
            resident((two_u, head_w)), resident((1, head_w)),
        ],
        out_specs=pl.BlockSpec((tb, head_w), lambda i: (i, 0)),
        compiler_params=pltpu.CompilerParams(
            dimension_semantics=("parallel",)),
    )(x, fused["w1"], fused["b1"], fused["wh"], fused["bh"],
      fused["whd"], fused["bhd"])

    # ---- phase 2: GLOBAL advantage mean (over batch AND action axes) -------
    # Tiny JAX-side reduction keeps the PyTorch `advantages.mean()` semantics
    # exact under batch tiling (padded rows excluded).
    adv_mean = (jnp.sum(head[:B, :A], dtype=jnp.float32)
                / jnp.float32(B * A)).reshape(1, 1)

    # ---- phase 3: finalize q = values + (adv - mean), lane-dense store -----
    q_pad = pl.pallas_call(
        functools.partial(_combine_kernel, A),
        out_shape=jax.ShapeDtypeStruct((b_pad, head_w), jnp.float32),
        grid=grid,
        in_specs=[
            pl.BlockSpec((1, 1), lambda i: (0, 0),
                         memory_space=pltpu.MemorySpace.SMEM),
            pl.BlockSpec((tb, head_w), lambda i: (i, 0)),
        ],
        out_specs=pl.BlockSpec((tb, head_w), lambda i: (i, 0)),
        compiler_params=pltpu.CompilerParams(
            dimension_semantics=("parallel",)),
    )(adv_mean, head)

    return q_pad[:B, :A]


def dueling_forward_ref(state, p):
    """Pure-JAX reference matching the PyTorch forward (un-fused params)."""
    feats = jax.nn.relu(state @ p["w1"] + p["b1"])
    values = jax.nn.relu(feats @ p["wv1"] + p["bv1"]) @ p["wv2"] + p["bv2"]
    adv = jax.nn.relu(feats @ p["wa1"] + p["ba1"]) @ p["wa2"] + p["ba2"]
    return values + (adv - jnp.mean(adv))


if __name__ == "__main__":
    STATE_SIZE, ACTION_SIZE, UNITS = 16, 4, 64

    key = jax.random.PRNGKey(0)
    kx, kp, kx2 = jax.random.split(key, 3)
    params = init_params(kp, STATE_SIZE, ACTION_SIZE, UNITS)

    # --- check 1: small batch, f32, single tile ------------------------------
    state = jax.random.normal(kx, (8, STATE_SIZE), jnp.float32)
    fused_f32 = prepare_params(params, jnp.float32)
    q = jax.block_until_ready(dueling_forward(state, fused_f32, ACTION_SIZE))
    ref = dueling_forward_ref(state, params)
    assert q.shape == (8, ACTION_SIZE)
    assert jnp.allclose(q, ref, atol=1e-5, rtol=1e-5), "f32 single-tile mismatch"

    # --- check 2: multi-tile batch grid + padding, global mean preserved -----
    state2 = jax.random.normal(kx2, (200, STATE_SIZE), jnp.float32)
    q2 = jax.block_until_ready(
        dueling_forward(state2, fused_f32, ACTION_SIZE, tile_b=64))
    ref2 = dueling_forward_ref(state2, params)
    assert q2.shape == (200, ACTION_SIZE)
    assert jnp.allclose(q2, ref2, atol=1e-4, rtol=1e-4), "f32 multi-tile mismatch"

    # --- check 3: bf16 operands (v6e/v7x MXU fast path), f32 accumulation ----
    fused_bf16 = prepare_params(params, jnp.bfloat16)
    q3 = jax.block_until_ready(dueling_forward(state, fused_bf16, ACTION_SIZE))
    assert q3.shape == (8, ACTION_SIZE)
    assert jnp.allclose(q3, ref, atol=1e-1, rtol=1e-1), "bf16 mismatch"

    print("KERNEL_OK")
</pallas_src>

<mosaic_0001>
module attributes {stable_mosaic.version = 11 : i64} {
  func.func @_head_kernel(%arg0: i32, %arg1: memref<8x16xf32, #tpu.memory_space<vmem>>, %arg2: memref<16x64xf32, #tpu.memory_space<vmem>>, %arg3: memref<1x64xf32, #tpu.memory_space<vmem>>, %arg4: memref<64x128xf32, #tpu.memory_space<vmem>>, %arg5: memref<1x128xf32, #tpu.memory_space<vmem>>, %arg6: memref<128x128xf32, #tpu.memory_space<vmem>>, %arg7: memref<1x128xf32, #tpu.memory_space<vmem>>, %arg8: memref<8x128xf32, #tpu.memory_space<vmem>>) attributes {dimension_semantics = [#tpu.dimension_semantics<parallel>], iteration_bounds = array<i64: 1>, scalar_prefetch = 0 : i64, scratch_operands = 0 : i64, tpu.core_type = #tpu.core_type<tc>, window_params = [{transform_indices = @transform_0, window_bounds = array<i64: 8, 16>}, {pipeline_mode = #tpu.pipeline_mode<synchronous>, transform_indices = @transform_1, window_bounds = array<i64: 16, 64>}, {pipeline_mode = #tpu.pipeline_mode<synchronous>, transform_indices = @transform_2, window_bounds = array<i64: 1, 64>}, {pipeline_mode = #tpu.pipeline_mode<synchronous>, transform_indices = @transform_3, window_bounds = array<i64: 64, 128>}, {pipeline_mode = #tpu.pipeline_mode<synchronous>, transform_indices = @transform_4, window_bounds = array<i64: 1, 128>}, {pipeline_mode = #tpu.pipeline_mode<synchronous>, transform_indices = @transform_5, window_bounds = array<i64: 128, 128>}, {pipeline_mode = #tpu.pipeline_mode<synchronous>, transform_indices = @transform_6, window_bounds = array<i64: 1, 128>}, {transform_indices = @transform_7, window_bounds = array<i64: 8, 128>}]} {
    %c0 = arith.constant 0 : index
    %c0_0 = arith.constant 0 : index
    %0 = vector.load %arg1[%c0, %c0_0] : memref<8x16xf32, #tpu.memory_space<vmem>>, vector<8x16xf32>
    %c0_1 = arith.constant 0 : index
    %c0_2 = arith.constant 0 : index
    %1 = vector.load %arg2[%c0_1, %c0_2] : memref<16x64xf32, #tpu.memory_space<vmem>>, vector<16x64xf32>
    %cst = arith.constant dense<0.000000e+00> : vector<8x64xf32>
    %2 = tpu.matmul %0, %1, %cst {dimension_numbers = #tpu.dot_dimension_numbers<[1], [0], [0], [1], [0, 0, 1, 1], [], []>} : vector<8x16xf32>, vector<16x64xf32>, vector<8x64xf32> -> vector<8x64xf32>
    %c0_3 = arith.constant 0 : index
    %c0_4 = arith.constant 0 : index
    %3 = vector.load %arg3[%c0_3, %c0_4] : memref<1x64xf32, #tpu.memory_space<vmem>>, vector<1x64xf32>
    %4 = vector.broadcast %3 : vector<1x64xf32> to vector<8x64xf32>
    %5 = arith.addf %2, %4 : vector<8x64xf32>
    %cst_5 = arith.constant 0.000000e+00 : f32
    %6 = vector.broadcast %cst_5 : f32 to vector<8x64xf32>
    %7 = arith.maximumf %5, %6 : vector<8x64xf32>
    %c0_6 = arith.constant 0 : index
    %c0_7 = arith.constant 0 : index
    %8 = vector.load %arg4[%c0_6, %c0_7] : memref<64x128xf32, #tpu.memory_space<vmem>>, vector<64x128xf32>
    %cst_8 = arith.constant dense<0.000000e+00> : vector<8x128xf32>
    %9 = tpu.matmul %7, %8, %cst_8 {dimension_numbers = #tpu.dot_dimension_numbers<[1], [0], [0], [1], [0, 0, 1, 1], [], []>} : vector<8x64xf32>, vector<64x128xf32>, vector<8x128xf32> -> vector<8x128xf32>
    %c0_9 = arith.constant 0 : index
    %c0_10 = arith.constant 0 : index
    %10 = vector.load %arg5[%c0_9, %c0_10] : memref<1x128xf32, #tpu.memory_space<vmem>>, vector<1x128xf32>
    %11 = vector.broadcast %10 : vector<1x128xf32> to vector<8x128xf32>
    %12 = arith.addf %9, %11 : vector<8x128xf32>
    %cst_11 = arith.constant 0.000000e+00 : f32
    %13 = vector.broadcast %cst_11 : f32 to vector<8x128xf32>
    %14 = arith.maximumf %12, %13 : vector<8x128xf32>
    %c0_12 = arith.constant 0 : index
    %c0_13 = arith.constant 0 : index
    %15 = vector.load %arg6[%c0_12, %c0_13] : memref<128x128xf32, #tpu.memory_space<vmem>>, vector<128x128xf32>
    %cst_14 = arith.constant dense<0.000000e+00> : vector<8x128xf32>
    %16 = tpu.matmul %14, %15, %cst_14 {dimension_numbers = #tpu.dot_dimension_numbers<[1], [0], [0], [1], [0, 0, 1, 1], [], []>} : vector<8x128xf32>, vector<128x128xf32>, vector<8x128xf32> -> vector<8x128xf32>
    %c0_15 = arith.constant 0 : index
    %c0_16 = arith.constant 0 : index
    %17 = vector.load %arg7[%c0_15, %c0_16] : memref<1x128xf32, #tpu.memory_space<vmem>>, vector<1x128xf32>
    %18 = vector.broadcast %17 : vector<1x128xf32> to vector<8x128xf32>
    %19 = arith.addf %16, %18 : vector<8x128xf32>
    %c0_17 = arith.constant 0 : index
    %c0_18 = arith.constant 0 : index
    %20 = vector.load %arg8[%c0_17, %c0_18] : memref<8x128xf32, #tpu.memory_space<vmem>>, vector<8x128xf32>
    tpu.vector_store %arg8[%c0_17, %c0_18], %19 {strides = array<i32>} : memref<8x128xf32, #tpu.memory_space<vmem>>, vector<8x128xf32>,
    return
  }
  func.func @transform_0(%arg0: i32) -> (i32, i32) {
    %c0_i32 = arith.constant 0 : i32
    %c0_i32_0 = arith.constant 0 : i32
    return %arg0, %c0_i32 : i32, i32
  }
  func.func @transform_1(%arg0: i32) -> (i32, i32) {
    %c0_i32 = arith.constant 0 : i32
    %c0_i32_0 = arith.constant 0 : i32
    %c0_i32_1 = arith.constant 0 : i32
    return %c0_i32, %c0_i32_0 : i32, i32
  }
  func.func @transform_2(%arg0: i32) -> (i32, i32) {
    %c0_i32 = arith.constant 0 : i32
    %c0_i32_0 = arith.constant 0 : i32
    %c0_i32_1 = arith.constant 0 : i32
    return %c0_i32, %c0_i32_0 : i32, i32
  }
  func.func @transform_3(%arg0: i32) -> (i32, i32) {
    %c0_i32 = arith.constant 0 : i32
    %c0_i32_0 = arith.constant 0 : i32
    %c0_i32_1 = arith.constant 0 : i32
    return %c0_i32, %c0_i32_0 : i32, i32
  }
  func.func @transform_4(%arg0: i32) -> (i32, i32) {
    %c0_i32 = arith.constant 0 : i32
    %c0_i32_0 = arith.constant 0 : i32
    %c0_i32_1 = arith.constant 0 : i32
    return %c0_i32, %c0_i32_0 : i32, i32
  }
  func.func @transform_5(%arg0: i32) -> (i32, i32) {
    %c0_i32 = arith.constant 0 : i32
    %c0_i32_0 = arith.constant 0 : i32
    %c0_i32_1 = arith.constant 0 : i32
    return %c0_i32, %c0_i32_0 : i32, i32
  }
  func.func @transform_6(%arg0: i32) -> (i32, i32) {
    %c0_i32 = arith.constant 0 : i32
    %c0_i32_0 = arith.constant 0 : i32
    %c0_i32_1 = arith.constant 0 : i32
    return %c0_i32, %c0_i32_0 : i32, i32
  }
  func.func @transform_7(%arg0: i32) -> (i32, i32) {
    %c0_i32 = arith.constant 0 : i32
    %c0_i32_0 = arith.constant 0 : i32
    return %arg0, %c0_i32 : i32, i32
  }
}

</mosaic_0001>

<llo_original>
// kernel: tpu_custom_call.1
$region0: #{tpu_custom_call.1}
  #allocation0 [shape = 'u32[]', space=smem, size = 0x4, offset = 0x4, fixed_abs, tag = 'smem constant byte address 0x4 - core index']
  #allocation1 [shape = 'u32[72,128]{1,0:T(1,128)}', space=vmem, size = 0x9000, scoped, tag = 'internal scratch']
  %s0 = inlined_call_operand.hbm [shape: f32[8,16], index: 0, kind: input, shape index: {}]
  %s1 = inlined_call_operand.hbm [shape: f32[16,64], index: 1, kind: input, shape index: {}]
  %s2 = inlined_call_operand.vmem [shape: f32[1,64], index: 2, kind: input, shape index: {}]
  %s3 = inlined_call_operand.hbm [shape: f32[64,128], index: 3, kind: input, shape index: {}]
  %s4 = inlined_call_operand.vmem [shape: f32[1,128], index: 4, kind: input, shape index: {}]
  %s5 = inlined_call_operand.hbm [shape: f32[128,128], index: 5, kind: input, shape index: {}]
  %s6 = inlined_call_operand.vmem [shape: f32[1,128], index: 6, kind: input, shape index: {}]
  %s7 = inlined_call_operand.hbm [shape: f32[8,128], index: 7, kind: output, shape index: {}]
  %s8 = sld [smem:[#allocation0]]
  $region54: #{tpu_custom_call.1} parent=0
    _
  %s10 = ssub.s32 1, %s8
  %s11 = scalar_select 0, %s10, %s8
  $region1: #{tpu_custom_call.1} parent=0
    #allocation2 [shape = 'u8[4096]{0}', space=vmem, size = 0x1000, scoped, tag = 'input window, operand 0, single buffered']
    #allocation3 [shape = 's32[1]{0}', space=sflag, size = 0x4, scoped, tag = 'scoped memory for tpu_custom_call.1']
    #allocation4 [shape = 's32[1]{0}', space=sflag, size = 0x4, scoped, tag = 'scoped memory for tpu_custom_call.1']
    #allocation5 [shape = 'u8[8192]{0}', space=vmem, size = 0x2000, scoped, tag = 'input window, operand 1, single buffered']
    #allocation6 [shape = 's32[1]{0}', space=sflag, size = 0x4, scoped, tag = 'scoped memory for tpu_custom_call.1']
    #allocation7 [shape = 'u8[32768]{0}', space=vmem, size = 0x8000, scoped, tag = 'input window, operand 3, single buffered']
    #allocation8 [shape = 'u8[65536]{0}', space=vmem, size = 0x10000, scoped, tag = 'input window, operand 5, single buffered']
    #allocation9 [shape = 's32[1]{0}', space=sflag, size = 0x4, scoped, tag = 'scoped memory for tpu_custom_call.1']
    #allocation10 [shape = 'u8[4096]{0}', space=vmem, size = 0x1000, scoped, tag = 'output window, operand 0, single buffered']
    %12 = vsyncpa [#allocation3], 0
    %13 = vsyncpa [#allocation6], 0
    %14 = vsyncpa [#allocation9], 0
    %15 = vsyncpa [#allocation4], 0
    // Predicated region
    $region2: #{tpu_custom_call.1} parent=1 // pred_check
      _
    $region3: #{tpu_custom_call.1} parent=1 // pred_check_branch
      %17 = sbr.rel (0) target = $region5
    $region4: #{tpu_custom_call.1} parent=1 // pred_region
      %19 = vsyncadd [#allocation3], 0
      %s21 = sshll.u32 %s0, 4
      %s22 = int_to_ptr.hbm [resolvable:$true] %s21
      %s23 = sshll.u32 [#allocation2], 4
      %s24 = int_to_ptr.vmem [resolvable:$true] %s23
      %26 = dma.hbm_to_vmem [thread:$0]  %s22, 128, %s24, [#allocation3]
    $region5: #{tpu_custom_call.1} parent=1 // pred_fallthru
      _
    // Predicated region
    $region6: #{tpu_custom_call.1} parent=1 // pred_check
      _
    $region7: #{tpu_custom_call.1} parent=1 // pred_check_branch
      %28 = sbr.rel (0) target = $region9
    $region8: #{tpu_custom_call.1} parent=1 // pred_region
      %30 = vsyncadd [#allocation6], 0
      %s31 = sshll.u32 %s1, 4
      %s32 = int_to_ptr.hbm [resolvable:$true] %s31
      %s33 = sshll.u32 [#allocation5], 4
      %s34 = int_to_ptr.vmem [resolvable:$true] %s33
      %39 = dma.hbm_to_vmem [thread:$0]  %s32, 256, %s34, [#allocation6], 128, 128, 8
    $region9: #{tpu_custom_call.1} parent=1 // pred_fallthru
      _
    // Predicated region
    $region10: #{tpu_custom_call.1} parent=1 // pred_check
      _
    $region11: #{tpu_custom_call.1} parent=1 // pred_check_branch
      %41 = sbr.rel (0) target = $region13
    $region12: #{tpu_custom_call.1} parent=1 // pred_region
      _
    $region13: #{tpu_custom_call.1} parent=1 // pred_fallthru
      _
    // Predicated region
    $region14: #{tpu_custom_call.1} parent=1 // pred_check
      _
    $region15: #{tpu_custom_call.1} parent=1 // pred_check_branch
      %43 = sbr.rel (0) target = $region17
    $region16: #{tpu_custom_call.1} parent=1 // pred_region
      %45 = vsyncadd [#allocation6], 0
      %s46 = sshll.u32 %s3, 4
      %s47 = int_to_ptr.hbm [resolvable:$true] %s46
      %s48 = sshll.u32 [#allocation7], 4
      %s49 = int_to_ptr.vmem [resolvable:$true] %s48
      %54 = dma.hbm_to_vmem [thread:$0]  %s47, 1024, %s49, [#allocation6], 128, 128, 8
    $region17: #{tpu_custom_call.1} parent=1 // pred_fallthru
      _
    // Predicated region
    $region18: #{tpu_custom_call.1} parent=1 // pred_check
      _
    $region19: #{tpu_custom_call.1} parent=1 // pred_check_branch
      %56 = sbr.rel (0) target = $region21
    $region20: #{tpu_custom_call.1} parent=1 // pred_region
      _
    $region21: #{tpu_custom_call.1} parent=1 // pred_fallthru
      _
    // Predicated region
    $region22: #{tpu_custom_call.1} parent=1 // pred_check
      _
    $region23: #{tpu_custom_call.1} parent=1 // pred_check_branch
      %58 = sbr.rel (0) target = $region25
    $region24: #{tpu_custom_call.1} parent=1 // pred_region
      %60 = vsyncadd [#allocation9], 0
      %s61 = sshll.u32 %s5, 4
      %s62 = int_to_ptr.hbm [resolvable:$true] %s61
      %s63 = sshll.u32 [#allocation8], 4
      %s64 = int_to_ptr.vmem [resolvable:$true] %s63
      %69 = dma.hbm_to_vmem [thread:$0]  %s62, 2048, %s64, [#allocation9], 128, 128, 8
    $region25: #{tpu_custom_call.1} parent=1 // pred_fallthru
      _
    // Predicated region
    $region26: #{tpu_custom_call.1} parent=1 // pred_check
      _
    $region27: #{tpu_custom_call.1} parent=1 // pred_check_branch
      %71 = sbr.rel (0) target = $region29
    $region28: #{tpu_custom_call.1} parent=1 // pred_region
      _
    $region29: #{tpu_custom_call.1} parent=1 // pred_fallthru
      _
    // Predicated region
    $region30: #{tpu_custom_call.1} parent=1 // pred_check
      _
    $region31: #{tpu_custom_call.1} parent=1 // pred_check_branch
      %73 = sbr.rel (0) target = $region33
    $region32: #{tpu_custom_call.1} parent=1 // pred_region
      %75 = dma.done [#allocation3], 128
    $region33: #{tpu_custom_call.1} parent=1 // pred_fallthru
      _
    // Predicated region
    $region34: #{tpu_custom_call.1} parent=1 // pred_check
      _
    $region35: #{tpu_custom_call.1} parent=1 // pred_check_branch
      %77 = sbr.rel (0) target = $region37
    $region36: #{tpu_custom_call.1} parent=1 // pred_region
      %79 = dma.done [#allocation6], 256
    $region37: #{tpu_custom_call.1} parent=1 // pred_fallthru
      _
    // Predicated region
    $region38: #{tpu_custom_call.1} parent=1 // pred_check
      _
    $region39: #{tpu_custom_call.1} parent=1 // pred_check_branch
      %81 = sbr.rel (0) target = $region41
    $region40: #{tpu_custom_call.1} parent=1 // pred_region
      %83 = dma.done [#allocation6], 1024
    $region41: #{tpu_custom_call.1} parent=1 // pred_fallthru
      _
    // Predicated region
    $region42: #{tpu_custom_call.1} parent=1 // pred_check
      _
    $region43: #{tpu_custom_call.1} parent=1 // pred_check_branch
      %85 = sbr.rel (0) target = $region45
    $region44: #{tpu_custom_call.1} parent=1 // pred_region
      %87 = dma.done [#allocation9], 2048
    $region45: #{tpu_custom_call.1} parent=1 // pred_fallthru
      _
    %v88 = vld [vmem:[#allocation2] sm:$0xff]
    %v89 = vld [vmem:[#allocation5] sm:$0xff]
    %v90 = vld [vmem:[#allocation5 + $0x8] sm:$0xff]
    %v91 = vld [vmem:[%s2] sm:$0x1]
    %v93 = vperm.slane %v91, 0
    %vm95 = vcmask 130048
    %v97 = vsel %vm95, %v88, 0
    %99 = vmatpush.msra.mxu0 0.0
    %100 = vmatpush.msra.mxu0 0.0
    %101 = vmatpush.msra.mxu0 0.0
    %102 = vmatpush.msra.mxu0 0.0
    %103 = vmatpush.msra.mxu0 0.0
    %104 = vmatpush.msra.mxu0 0.0
    %105 = vmatpush.msra.mxu0 0.0
    %106 = vmatpush.msra.mxu0 0.0
    %107 = vmatpush.msra.mxu0 0.0
    %108 = vmatpush.msra.mxu0 0.0
    %109 = vmatpush.msra.mxu0 0.0
    %110 = vmatpush.msra.mxu0 0.0
    %111 = vmatpush.msra.mxu0 0.0
    %112 = vmatpush.msra.mxu0 0.0
    %113 = vmatpush.msra.mxu0 %v90
    %114 = vmatpush.msra.mxu0 %v89
    %115 = vmatmul.f32.gmra.mxu0 %v97
    %v116 = vpop.f32.mrf.mxu0
    %v117 = vadd.f32 %v93, %v116
    %118 = vdwg.mxu0
    %v119 = vmax.f32 %v117, 0.0
    %v120 = vld [vmem:[#allocation7] sm:$0xff]
    %v121 = vld [vmem:[#allocation7 + $0x8] sm:$0xff]
    %v122 = vld [vmem:[#allocation7 + $0x10] sm:$0xff]
    %v123 = vld [vmem:[#allocation7 + $0x18] sm:$0xff]
    %v124 = vld [vmem:[#allocation7 + $0x20] sm:$0xff]
    %v125 = vld [vmem:[#allocation7 + $0x28] sm:$0xff]
    %v126 = vld [vmem:[#allocation7 + $0x30] sm:$0xff]
    %v127 = vld [vmem:[#allocation7 + $0x38] sm:$0xff]
    %v128 = vld [vmem:[%s4] sm:$0x1]
    %v130 = vperm.slane %v128, 0
    %vm132 = vcmask 523264
    %v134 = vsel %vm132, %v119, 0
    %136 = vmatpush.msra.mxu0 0.0
    %137 = vmatpush.msra.mxu0 0.0
    %138 = vmatpush.msra.mxu0 0.0
    %139 = vmatpush.msra.mxu0 0.0
    %140 = vmatpush.msra.mxu0 0.0
    %141 = vmatpush.msra.mxu0 0.0
    %142 = vmatpush.msra.mxu0 0.0
    %143 = vmatpush.msra.mxu0 0.0
    %144 = vmatpush.msra.mxu0 %v127
    %145 = vmatpush.msra.mxu0 %v126
    %146 = vmatpush.msra.mxu0 %v125
    %147 = vmatpush.msra.mxu0 %v124
    %148 = vmatpush.msra.mxu0 %v123
    %149 = vmatpush.msra.mxu0 %v122
    %150 = vmatpush.msra.mxu0 %v121
    %151 = vmatpush.msra.mxu0 %v120
    %152 = vmatmul.f32.gmra.mxu0 %v134
    %v153 = vpop.f32.mrf.mxu0
    %v154 = vadd.f32 %v130, %v153
    %155 = vdwg.mxu0
    %v156 = vmax.f32 %v154, 0.0
    %v157 = vld [vmem:[#allocation8] sm:$0xff]
    %v158 = vld [vmem:[#allocation8 + $0x8] sm:$0xff]
    %v159 = vld [vmem:[#allocation8 + $0x10] sm:$0xff]
    %v160 = vld [vmem:[#allocation8 + $0x18] sm:$0xff]
    %v161 = vld [vmem:[#allocation8 + $0x20] sm:$0xff]
    %v162 = vld [vmem:[#allocation8 + $0x28] sm:$0xff]
    %v163 = vld [vmem:[#allocation8 + $0x30] sm:$0xff]
    %v164 = vld [vmem:[#allocation8 + $0x38] sm:$0xff]
    %v165 = vld [vmem:[#allocation8 + $0x40] sm:$0xff]
    %v166 = vld [vmem:[#allocation8 + $0x48] sm:$0xff]
    %v167 = vld [vmem:[#allocation8 + $0x50] sm:$0xff]
    %v168 = vld [vmem:[#allocation8 + $0x58] sm:$0xff]
    %v169 = vld [vmem:[#allocation8 + $0x60] sm:$0xff]
    %v170 = vld [vmem:[#allocation8 + $0x68] sm:$0xff]
    %v171 = vld [vmem:[#allocation8 + $0x70] sm:$0xff]
    %v172 = vld [vmem:[#allocation8 + $0x78] sm:$0xff]
    %v173 = vld [vmem:[%s6] sm:$0x1]
    %v175 = vperm.slane %v173, 0
    %177 = vmatpush.msra.mxu0 %v172
    %178 = vmatpush.msra.mxu0 %v171
    %179 = vmatpush.msra.mxu0 %v170
    %180 = vmatpush.msra.mxu0 %v169
    %181 = vmatpush.msra.mxu0 %v168
    %182 = vmatpush.msra.mxu0 %v167
    %183 = vmatpush.msra.mxu0 %v166
    %184 = vmatpush.msra.mxu0 %v165
    %185 = vmatpush.msra.mxu0 %v164
    %186 = vmatpush.msra.mxu0 %v163
    %187 = vmatpush.msra.mxu0 %v162
    %188 = vmatpush.msra.mxu0 %v161
    %189 = vmatpush.msra.mxu0 %v160
    %190 = vmatpush.msra.mxu0 %v159
    %191 = vmatpush.msra.mxu0 %v158
    %192 = vmatpush.msra.mxu0 %v157
    %193 = vmatmul.f32.gmra.mxu0 %v156
    %v194 = vpop.f32.mrf.mxu0
    %v195 = vadd.f32 %v175, %v194
    %196 = vdwg.mxu0
    %197 = vst [vmem:[#allocation10] sm:$0xff] %v195
    // Predicated region
    $region46: #{tpu_custom_call.1} parent=1 // pred_check
      _
    $region47: #{tpu_custom_call.1} parent=1 // pred_check_branch
      %199 = sbr.rel (0) target = $region49
    $region48: #{tpu_custom_call.1} parent=1 // pred_region
      %201 = vsyncadd [#allocation4], 0
      %s203 = sshll.u32 [#allocation10], 4
      %s204 = int_to_ptr.vmem [resolvable:$true] %s203
      %s205 = sshll.u32 %s7, 4
      %s206 = int_to_ptr.hbm [resolvable:$true] %s205
      %208 = dma.vmem_to_hbm [thread:$0]  %s204, 128, %s206, [#allocation4]
    $region49: #{tpu_custom_call.1} parent=1 // pred_fallthru
      _
    // Predicated region
    $region50: #{tpu_custom_call.1} parent=1 // pred_check
      _
    $region51: #{tpu_custom_call.1} parent=1 // pred_check_branch
      %210 = sbr.rel (0) target = $region53
    $region52: #{tpu_custom_call.1} parent=1 // pred_region
      %212 = dma.done [#allocation4], 128
    $region53: #{tpu_custom_call.1} parent=1 // pred_fallthru
      _
    %213 = vsyncpa [#allocation3], 1
    %214 = vsyncpa [#allocation6], 1
    %215 = vsyncpa [#allocation9], 1
    %216 = vsyncpa [#allocation4], 1

</llo_original>
